<compile_context>
chip_gen: v7x
topology: tpu7x:2x2x1
jax: 0.10.0
libtpu: 0.0.40
codegen_flags: <defaults>
</compile_context>

<pallas_src>
import functools

import jax
import jax.numpy as jnp
from jax.experimental import pallas as pl
from jax.experimental.pallas import tpu as pltpu


NEG_INF = -1e30  # finite sentinel (NOT -inf): keeps exp(m_old - m_new) NaN-free
                 # for rows whose forced token lives in a later vocab tile.


def _round_up(x, m):
    return ((x + m - 1) // m) * m


def _tpu_config():
    """(per-core VMEM bytes, default #vocab splits) for the current backend."""
    kind = ""
    try:
        kind = jax.devices()[0].device_kind.lower()
    except Exception:
        pass
    vmem_bytes = None
    try:
        vmem_bytes = int(pltpu.get_tpu_info().vmem_capacity_bytes)
    except Exception:
        vmem_bytes = None
    if vmem_bytes is None:
        vmem_bytes = (64 << 20) if "v7" in kind else (128 << 20)
    # v7x has 2 TensorCores per chip: split the vocab stream across them.
    n_vsplit = 2 if "v7" in kind else 1
    return vmem_bytes, n_vsplit


def _auto_tv(B, H, V, n_vsplit, vmem_bytes, itemsize):
    """Largest 128-multiple vocab tile that fits a per-chip VMEM budget.

    Budget: 2*H*tv*isz (double-buffered weight stream) + 2*B*tv*4 (logits out)
    + 2*B*H*isz (hidden) + headroom <= ~70% of physical per-core VMEM.
    """
    tb = B
    budget = int(vmem_bytes * 0.70) - (2 << 20)
    fixed = 2 * tb * H * itemsize
    per_tv = 2 * H * itemsize + 2 * tb * 4
    tv = max(budget - fixed, 128 * per_tv) // per_tv
    tv = max(128, (tv // 128) * 128)
    tv = min(tv, 8192)
    v_split = _round_up(-(-V // n_vsplit), 128)
    return min(tv, v_split)


def _gen_step_kernel(forced_ref, h_ref, w_ref, logits_ref, plse_ref,
                     m_sc, l_sc, *, tv, n_tiles, v_real):
    """One vocab tile of a prefix-constrained generation step.

    Grid = (batch_tiles, vocab_splits, vocab_tiles); the last axis streams the
    LM-head weight ("arbitrary"), the split axis is "parallel" (v7x megacore).

    forced_ref: (TB, 1)      i32   forced-prefix token id per row, -1 = any
    h_ref:      (TB, H)      bf16  decoder hidden states
    w_ref:      (H, TV)      bf16  LM-head weight tile (pre-transposed [H, V])
    logits_ref: (TB, TV)     f32   out: masked (un-normalized) logits
    plse_ref:   (1, TB, 1)   f32   out: per-(split,row) partial log-sum-exp
    """
    s = pl.program_id(1)            # vocab split (megacore axis)
    v = pl.program_id(2)            # streamed vocab tile within the split
    off = (s * n_tiles + v) * tv    # global column offset (scalar)

    @pl.when(v == 0)
    def _():
        m_sc[...] = jnp.full_like(m_sc, -jnp.inf)
        l_sc[...] = jnp.zeros_like(l_sc)

    # --- LM-head projection for this vocab tile (MXU: bf16 in, f32 acc) ---
    logits = jnp.dot(h_ref[...], w_ref[...], preferred_element_type=jnp.float32)

    # --- PrefixConstrainedLogitsProcessor mask, rebuilt from one scalar per
    #     row; local iota only (offset folded into the scalar comparands). ---
    forced = forced_ref[...]                                      # (TB, 1)
    local = jax.lax.broadcasted_iota(jnp.int32, logits.shape, 1)  # (TB, TV)
    in_vocab = local < (v_real - off)                             # mask V-pad
    allowed = in_vocab & ((forced < 0) | (local == (forced - off)))
    masked = jnp.where(allowed, logits, NEG_INF)
    logits_ref[...] = masked

    # --- online log-sum-exp carry (argmax + normalization happen in a tiny
    #     fused XLA epilogue over the materialized masked logits). ---
    tile_max = jnp.max(masked, axis=-1, keepdims=True)            # (TB, 1)
    m_old = m_sc[...]
    m_new = jnp.maximum(m_old, tile_max)
    l_sc[...] = (l_sc[...] * jnp.exp(m_old - m_new)
                 + jnp.sum(jnp.exp(masked - m_new), axis=-1, keepdims=True))
    m_sc[...] = m_new

    @pl.when(v == n_tiles - 1)
    def _():
        plse_ref[0] = m_sc[...] + jnp.log(l_sc[...])


def prepare_lm_head(lm_head_weight, dtype=jnp.bfloat16):
    """One-time prep (hoisted out of the decode loop): nn.Linear weight
    [V, H] -> lane-dense [H, V] in the streaming dtype."""
    return jnp.asarray(lm_head_weight).astype(dtype).T


def generation_step(hidden, w_hv, forced_ids, *, tv=None, n_vsplit=None,
                    compute_dtype=jnp.bfloat16):
    """One prefix-constrained greedy decode step.

    hidden:     [B, H]   decoder hidden states
    w_hv:       [H, V]   LM-head weight, output of `prepare_lm_head`
    forced_ids: [B] i32  forced prefix token id per row, -1 = unconstrained

    Returns (logprobs [B, V] f32, next_token [B] i32).
    """
    B, H = hidden.shape
    Hw, V = w_hv.shape
    assert H == Hw
    tb = B                                   # full batch per tile (decode B)

    vmem_bytes, default_split = _tpu_config()
    if n_vsplit is None:
        n_vsplit = default_split
    isz = jnp.dtype(compute_dtype).itemsize
    if tv is None:
        tv = _auto_tv(B, H, V, n_vsplit, vmem_bytes, isz)
    assert tv % 128 == 0

    v_split = -(-V // n_vsplit)              # vocab columns per split
    n_tiles = -(-v_split // tv)              # streamed tiles per split
    v_pad = n_vsplit * n_tiles * tv          # padded vocab (pad masked in-krnl)

    h = hidden.astype(compute_dtype)
    w = w_hv.astype(compute_dtype)
    if v_pad != V:
        w = jnp.pad(w, ((0, 0), (0, v_pad - V)))
    forced_col = forced_ids.astype(jnp.int32).reshape(B, 1)

    # VMEM sizing derived from the chosen tiles (double buffers), clamped to
    # ~90% of the physical per-core capacity of the current chip.
    vmem_use = (2 * H * tv * isz             # double-buffered weight stream
                + 2 * tb * tv * 4            # double-buffered logits out tile
                + 2 * tb * H * isz           # hidden tile
                + 16 * tb * 4                # forced ids / partial lse / scratch
                + (2 << 20))                 # compiler headroom
    vmem_limit = min(max(vmem_use, 16 << 20), int(vmem_bytes * 0.9))

    grid = (B // tb, n_vsplit, n_tiles)
    kernel = functools.partial(_gen_step_kernel, tv=tv, n_tiles=n_tiles,
                               v_real=V)

    masked_logits, plse = pl.pallas_call(
        kernel,
        out_shape=(
            # TODO(synk): could be bf16 if downstream candidate scoring
            # tolerates it (halves the [B, V] HBM traffic); kept f32 here.
            jax.ShapeDtypeStruct((B, v_pad), jnp.float32),
            jax.ShapeDtypeStruct((n_vsplit, B, 1), jnp.float32),
        ),
        grid_spec=pltpu.PrefetchScalarGridSpec(
            num_scalar_prefetch=0,
            grid=grid,
            in_specs=[
                pl.BlockSpec((tb, 1), lambda b, s, v: (b, 0)),    # forced ids
                pl.BlockSpec((tb, H), lambda b, s, v: (b, 0)),    # hidden
                pl.BlockSpec((H, tv),                             # weight
                             lambda b, s, v: (0, s * n_tiles + v)),
            ],
            out_specs=[
                pl.BlockSpec((tb, tv),                            # masked logits
                             lambda b, s, v: (b, s * n_tiles + v)),
                pl.BlockSpec((1, tb, 1), lambda b, s, v: (s, b, 0)),  # part. lse
            ],
            scratch_shapes=[
                pltpu.VMEM((tb, 1), jnp.float32),   # running max
                pltpu.VMEM((tb, 1), jnp.float32),   # running sum-exp
            ],
        ),
        compiler_params=pltpu.CompilerParams(
            dimension_semantics=("parallel", "parallel", "arbitrary"),
            vmem_limit_bytes=vmem_limit,
        ),
    )(forced_col, h, w)

    # Cheap epilogue in plain JAX (XLA fuses these elementwise / reduce ops;
    # no second Pallas pass re-running the fine-grained weight-stream grid).
    masked = masked_logits[:, :V]
    lse = jax.nn.logsumexp(plse[:, :, 0], axis=0)          # combine splits
    logprobs = masked - lse[:, None]
    next_tok = jnp.argmax(masked, axis=-1).astype(jnp.int32)
    return logprobs, next_tok


def _reference(hidden, w_hv, forced_ids, compute_dtype=jnp.bfloat16):
    logits = jnp.dot(hidden.astype(compute_dtype), w_hv.astype(compute_dtype),
                     preferred_element_type=jnp.float32)
    V = w_hv.shape[1]
    col = jnp.arange(V, dtype=jnp.int32)[None, :]
    forced = forced_ids.astype(jnp.int32)[:, None]
    allowed = (forced < 0) | (col == forced)
    masked = jnp.where(allowed, logits, NEG_INF)
    logprob = jax.nn.log_softmax(masked, axis=-1)
    tok = jnp.argmax(masked, axis=-1).astype(jnp.int32)
    return logprob, tok


if __name__ == "__main__":
    key = jax.random.PRNGKey(0)
    B, H = 8, 256      # batch, decoder hidden (small synthetic)

    def make_case(k, V):
        k_h, k_w, k_pfx = jax.random.split(k, 3)
        hidden = jax.random.normal(k_h, (B, H), jnp.float32)
        # nn.Linear(H, V) weight layout is [V, H].
        lm_head_weight = jax.random.normal(k_w, (V, H), jnp.float32) * 0.05
        # Prefix constraint (mirrors `next_allowed_token`): first half of the
        # batch is still inside the forced prefix -> exactly one allowed id;
        # the rest is unconstrained (-1 -> whole vocab allowed).
        prefix_ids = jax.random.randint(k_pfx, (B // 2,), 0, V, dtype=jnp.int32)
        forced_ids = jnp.full((B,), -1, jnp.int32).at[: B // 2].set(prefix_ids)
        return hidden, lm_head_weight, forced_ids, prefix_ids

    def check(hidden, lm_head_weight, forced_ids, prefix_ids, **kw):
        # One-time weight prep, hoisted out of the decode loop: [V,H]->[H,V].
        w_hv = prepare_lm_head(lm_head_weight)
        step = jax.jit(functools.partial(generation_step, **kw))
        logprobs, next_tok = step(hidden, w_hv, forced_ids)
        jax.block_until_ready((logprobs, next_tok))
        ref_lp, ref_tok = _reference(hidden, w_hv, forced_ids)
        assert jnp.allclose(logprobs, ref_lp, atol=2e-3, rtol=2e-3), (
            float(jnp.max(jnp.abs(logprobs - ref_lp))))
        assert jnp.array_equal(next_tok, ref_tok)
        # Constrained rows must pick exactly the forced prefix token.
        assert jnp.array_equal(next_tok[: B // 2], prefix_ids)

    k1, k2, k3 = jax.random.split(key, 3)
    # 1) multi-tile vocab stream (V=512, four 128-wide weight tiles).
    check(*make_case(k1, 512), tv=128)
    # 2) vocab size that is not a tile multiple (in-kernel pad masking), auto tv.
    check(*make_case(k2, 500))
    # 3) explicit 2-way vocab split (v7x dual-TensorCore path; also valid on 1 TC).
    check(*make_case(k3, 512), tv=128, n_vsplit=2)

    print("KERNEL_OK")
</pallas_src>

<mosaic_0001>
module attributes {stable_mosaic.version = 11 : i64} {
  func.func @_gen_step_kernel(%arg0: i32, %arg1: i32, %arg2: i32, %arg3: memref<8x1xi32, #tpu.memory_space<vmem>>, %arg4: memref<8x256xbf16, #tpu.memory_space<vmem>>, %arg5: memref<256x128xbf16, #tpu.memory_space<vmem>>, %arg6: memref<8x128xf32, #tpu.memory_space<vmem>>, %arg7: memref<1x8x1xf32, #tpu.memory_space<vmem>>, %arg8: memref<8x1xf32, #tpu.memory_space<vmem>>, %arg9: memref<8x1xf32, #tpu.memory_space<vmem>>) attributes {dimension_semantics = [#tpu.dimension_semantics<parallel>, #tpu.dimension_semantics<parallel>, #tpu.dimension_semantics<arbitrary>], iteration_bounds = array<i64: 1, 1, 4>, scalar_prefetch = 0 : i64, scratch_operands = 2 : i64, tpu.core_type = #tpu.core_type<tc>, window_params = [{transform_indices = @transform_0, window_bounds = array<i64: 8, 1>}, {transform_indices = @transform_1, window_bounds = array<i64: 8, 256>}, {transform_indices = @transform_2, window_bounds = array<i64: 256, 128>}, {transform_indices = @transform_3, window_bounds = array<i64: 8, 128>}, {transform_indices = @transform_4, window_bounds = array<i64: 1, 8, 1>}]} {
    %c4_i32 = arith.constant 4 : i32
    %0 = arith.muli %arg1, %c4_i32 : i32
    %1 = arith.addi %0, %arg2 : i32
    %c128_i32 = arith.constant 128 : i32
    %2 = arith.muli %1, %c128_i32 : i32
    %c0_i32 = arith.constant 0 : i32
    %3 = arith.cmpi eq, %arg2, %c0_i32 : i32
    %4 = arith.extui %3 : i1 to i32
    %c0_i32_0 = arith.constant 0 : i32
    %5 = arith.cmpi ne, %4, %c0_i32_0 : i32
    scf.if %5 {
      %cst_21 = arith.constant 0xFF800000 : f32
      %45 = vector.broadcast %cst_21 : f32 to vector<8x1xf32>
      %c0_22 = arith.constant 0 : index
      %c0_23 = arith.constant 0 : index
      %46 = vector.load %arg8[%c0_22, %c0_23] : memref<8x1xf32, #tpu.memory_space<vmem>>, vector<8x1xf32>
      tpu.vector_store %arg8[%c0_22, %c0_23], %45 {strides = array<i32>} : memref<8x1xf32, #tpu.memory_space<vmem>>, vector<8x1xf32>,
      %cst_24 = arith.constant 0.000000e+00 : f32
      %47 = vector.broadcast %cst_24 : f32 to vector<8x1xf32>
      %c0_25 = arith.constant 0 : index
      %c0_26 = arith.constant 0 : index
      %48 = vector.load %arg9[%c0_25, %c0_26] : memref<8x1xf32, #tpu.memory_space<vmem>>, vector<8x1xf32>
      tpu.vector_store %arg9[%c0_25, %c0_26], %47 {strides = array<i32>} : memref<8x1xf32, #tpu.memory_space<vmem>>, vector<8x1xf32>,
    } else {
    }
    %c0 = arith.constant 0 : index
    %c0_1 = arith.constant 0 : index
    %6 = vector.load %arg4[%c0, %c0_1] : memref<8x256xbf16, #tpu.memory_space<vmem>>, vector<8x256xbf16>
    %c0_2 = arith.constant 0 : index
    %c0_3 = arith.constant 0 : index
    %7 = vector.load %arg5[%c0_2, %c0_3] : memref<256x128xbf16, #tpu.memory_space<vmem>>, vector<256x128xbf16>
    %cst = arith.constant dense<0.000000e+00> : vector<8x128xf32>
    %8 = tpu.matmul %6, %7, %cst {dimension_numbers = #tpu.dot_dimension_numbers<[1], [0], [0], [1], [0, 0, 1, 1], [], []>} : vector<8x256xbf16>, vector<256x128xbf16>, vector<8x128xf32> -> vector<8x128xf32>
    %c0_4 = arith.constant 0 : index
    %c0_5 = arith.constant 0 : index
    %9 = vector.load %arg3[%c0_4, %c0_5] : memref<8x1xi32, #tpu.memory_space<vmem>>, vector<8x1xi32>
    %10 = tpu.iota {dimensions = array<i32: 1>} : vector<8x128xi32>
    %c512_i32 = arith.constant 512 : i32
    %11 = arith.subi %c512_i32, %2 : i32
    %12 = vector.broadcast %11 : i32 to vector<8x128xi32>
    %13 = arith.cmpi slt, %10, %12 : vector<8x128xi32>
    %c0_i32_6 = arith.constant 0 : i32
    %14 = vector.broadcast %c0_i32_6 : i32 to vector<8x1xi32>
    %15 = arith.cmpi slt, %9, %14 : vector<8x1xi32>
    %16 = vector.broadcast %2 : i32 to vector<8x1xi32>
    %17 = arith.subi %9, %16 : vector<8x1xi32>
    %18 = vector.broadcast %17 : vector<8x1xi32> to vector<8x128xi32>
    %19 = arith.cmpi eq, %10, %18 : vector<8x128xi32>
    %20 = vector.broadcast %15 : vector<8x1xi1> to vector<8x128xi1>
    %21 = arith.ori %20, %19 : vector<8x128xi1>
    %22 = arith.andi %13, %21 : vector<8x128xi1>
    %cst_7 = arith.constant -1.000000e+30 : f32
    %23 = vector.broadcast %cst_7 : f32 to vector<8x128xf32>
    %24 = arith.select %22, %8, %23 : vector<8x128xi1>, vector<8x128xf32>
    %c0_8 = arith.constant 0 : index
    %c0_9 = arith.constant 0 : index
    %25 = vector.load %arg6[%c0_8, %c0_9] : memref<8x128xf32, #tpu.memory_space<vmem>>, vector<8x128xf32>
    tpu.vector_store %arg6[%c0_8, %c0_9], %24 {strides = array<i32>} : memref<8x128xf32, #tpu.memory_space<vmem>>, vector<8x128xf32>,
    %cst_10 = arith.constant dense<0xFF800000> : vector<8xf32>
    %26 = vector.multi_reduction <maximumf>, %24, %cst_10 [1] : vector<8x128xf32> to vector<8xf32>
    %27 = vector.shape_cast %26 : vector<8xf32> to vector<8x1xf32>
    %c0_11 = arith.constant 0 : index
    %c0_12 = arith.constant 0 : index
    %28 = vector.load %arg8[%c0_11, %c0_12] : memref<8x1xf32, #tpu.memory_space<vmem>>, vector<8x1xf32>
    %29 = arith.maximumf %28, %27 : vector<8x1xf32>
    %c0_13 = arith.constant 0 : index
    %c0_14 = arith.constant 0 : index
    %30 = vector.load %arg9[%c0_13, %c0_14] : memref<8x1xf32, #tpu.memory_space<vmem>>, vector<8x1xf32>
    %31 = arith.subf %28, %29 : vector<8x1xf32>
    %32 = math.exp %31 : vector<8x1xf32>
    %33 = arith.mulf %30, %32 : vector<8x1xf32>
    %34 = vector.broadcast %29 : vector<8x1xf32> to vector<8x128xf32>
    %35 = arith.subf %24, %34 : vector<8x128xf32>
    %36 = math.exp %35 : vector<8x128xf32>
    %cst_15 = arith.constant dense<0.000000e+00> : vector<8xf32>
    %37 = vector.multi_reduction <add>, %36, %cst_15 [1] : vector<8x128xf32> to vector<8xf32>
    %38 = vector.shape_cast %37 : vector<8xf32> to vector<8x1xf32>
    %39 = arith.addf %33, %38 : vector<8x1xf32>
    %c0_16 = arith.constant 0 : index
    %c0_17 = arith.constant 0 : index
    %40 = vector.load %arg9[%c0_16, %c0_17] : memref<8x1xf32, #tpu.memory_space<vmem>>, vector<8x1xf32>
    tpu.vector_store %arg9[%c0_16, %c0_17], %39 {strides = array<i32>} : memref<8x1xf32, #tpu.memory_space<vmem>>, vector<8x1xf32>,
    %c0_18 = arith.constant 0 : index
    %c0_19 = arith.constant 0 : index
    %41 = vector.load %arg8[%c0_18, %c0_19] : memref<8x1xf32, #tpu.memory_space<vmem>>, vector<8x1xf32>
    tpu.vector_store %arg8[%c0_18, %c0_19], %29 {strides = array<i32>} : memref<8x1xf32, #tpu.memory_space<vmem>>, vector<8x1xf32>,
    %c3_i32 = arith.constant 3 : i32
    %42 = arith.cmpi eq, %arg2, %c3_i32 : i32
    %43 = arith.extui %42 : i1 to i32
    %c0_i32_20 = arith.constant 0 : i32
    %44 = arith.cmpi ne, %43, %c0_i32_20 : i32
    scf.if %44 {
      %c0_21 = arith.constant 0 : index
      %c0_22 = arith.constant 0 : index
      %45 = vector.load %arg8[%c0_21, %c0_22] : memref<8x1xf32, #tpu.memory_space<vmem>>, vector<8x1xf32>
      %c0_23 = arith.constant 0 : index
      %c0_24 = arith.constant 0 : index
      %46 = vector.load %arg9[%c0_23, %c0_24] : memref<8x1xf32, #tpu.memory_space<vmem>>, vector<8x1xf32>
      %47 = math.log %46 : vector<8x1xf32>
      %48 = arith.addf %45, %47 : vector<8x1xf32>
      %c0_25 = arith.constant 0 : index
      %c0_26 = arith.constant 0 : index
      %c0_27 = arith.constant 0 : index
      %49 = vector.load %arg7[%c0_25, %c0_26, %c0_27] : memref<1x8x1xf32, #tpu.memory_space<vmem>>, vector<1x8x1xf32>
      %50 = vector.shape_cast %49 : vector<1x8x1xf32> to vector<8x1xf32>
      %51 = vector.shape_cast %48 : vector<8x1xf32> to vector<1x8x1xf32>
      tpu.vector_store %arg7[%c0_25, %c0_26, %c0_27], %51 {strides = array<i32>} : memref<1x8x1xf32, #tpu.memory_space<vmem>>, vector<1x8x1xf32>,
    } else {
    }
    return
  }
  func.func @transform_0(%arg0: i32, %arg1: i32, %arg2: i32) -> (i32, i32) {
    %c0_i32 = arith.constant 0 : i32
    %c0_i32_0 = arith.constant 0 : i32
    return %arg0, %c0_i32 : i32, i32
  }
  func.func @transform_1(%arg0: i32, %arg1: i32, %arg2: i32) -> (i32, i32) {
    %c0_i32 = arith.constant 0 : i32
    %c0_i32_0 = arith.constant 0 : i32
    return %arg0, %c0_i32 : i32, i32
  }
  func.func @transform_2(%arg0: i32, %arg1: i32, %arg2: i32) -> (i32, i32) {
    %c4_i32 = arith.constant 4 : i32
    %0 = arith.muli %arg1, %c4_i32 : i32
    %1 = arith.addi %0, %arg2 : i32
    %c0_i32 = arith.constant 0 : i32
    %c0_i32_0 = arith.constant 0 : i32
    return %c0_i32, %1 : i32, i32
  }
  func.func @transform_3(%arg0: i32, %arg1: i32, %arg2: i32) -> (i32, i32) {
    %c4_i32 = arith.constant 4 : i32
    %0 = arith.muli %arg1, %c4_i32 : i32
    %1 = arith.addi %0, %arg2 : i32
    %c0_i32 = arith.constant 0 : i32
    return %arg0, %1 : i32, i32
  }
  func.func @transform_4(%arg0: i32, %arg1: i32, %arg2: i32) -> (i32, i32, i32) {
    %c0_i32 = arith.constant 0 : i32
    %c0_i32_0 = arith.constant 0 : i32
    return %arg1, %arg0, %c0_i32 : i32, i32, i32
  }
}

</mosaic_0001>

<llo_original>
// kernel: generation_step.1
$region0: #{generation_step.1}
  #allocation0 [shape = 'u32[]', space=smem, size = 0x4, offset = 0x4, fixed_abs, tag = 'smem constant byte address 0x4 - core index']
  #allocation1 [shape = 'u32[144,128]{1,0:T(1,128)}', space=vmem, size = 0x12000, scoped, tag = 'internal scratch']
  #allocation2 [shape = 'f32[8,1]{1,0:T(8,128)}', space=vmem, size = 0x1000, scoped, tag = 'scratch operand']
  #allocation3 [shape = 'f32[8,1]{1,0:T(8,128)}', space=vmem, size = 0x1000, scoped, tag = 'scratch operand']
  %s0 = inlined_call_operand.vmem [shape: s32[8,1], index: 0, kind: input, shape index: {}]
  %s1 = inlined_call_operand.vmem [shape: bf16[8,256], index: 1, kind: input, shape index: {}]
  %s2 = inlined_call_operand.hbm [shape: bf16[256,512], index: 2, kind: input, shape index: {}]
  %s3 = inlined_call_operand.vmem [shape: f32[8,512], index: 3, kind: output, shape index: {0}]
  %s4 = inlined_call_operand.vmem [shape: f32[1,8,1], index: 4, kind: output, shape index: {1}]
  %5 = xla_tuple %s3, %s4
  %s6 = sld [smem:[#allocation0]]
  $region65: #{generation_step.1} parent=0
    _
  %s8 = ssub.s32 1, %s6
  %s9 = scalar_select 0, %s8, %s6
  $region1: #{generation_step.1} parent=0
    #allocation4 [shape = 'u8[131072]{0}', space=vmem, size = 0x20000, scoped, tag = 'input window, operand 2']
    #allocation5 [shape = 's32[2]{0}', space=sflag, size = 0x8, scoped, tag = 'scoped memory for generation_step.1']
    %10 = vsyncpa [#allocation5], 0
    %s11 = scalar_lea.sflag [#allocation5], 1
    %12 = vsyncpa %s11, 0
    loop: start=0, step=1, limit=6
    $region2: #{generation_step.1} parent=1 // loop_pre_header
      _
    $region3: #{generation_step.1} parent=1 // loop_header
      %s14 = sphi 0, %s18
      %p15 = scmp.ge.s32.totalorder %s14, 6
      %s21 = sphi 0, %s40
      %s22 = sphi 0, %s36
      %s23 = sphi 0, %s32
      %s24 = sphi 0, %s21
      %s25 = sphi 0, %s22
      %s26 = sphi 0, %s23
      %s27 = sphi 0, %s24
      %s28 = sphi 0, %s25
      %s29 = sphi 0, %s26
      %s43 = sphi 0, %s45
      %s46 = sphi 0, %s43
      %s47 = sphi 0, %s46
      %s63 = sphi 0, %s47
      %s69 = sphi 0, %s71
      %s72 = sphi 0, %s69
      %s73 = sphi 0, %s72
      %s89 = sphi 0, %s73
      %s99 = sphi 0, %s101
      %s102 = sphi 0, %s99
      %s103 = sphi 0, %s102
      %s119 = sphi 0, %s103
      %s131 = sphi 0, %s133
      %s134 = sphi 0, %s131
      %s135 = sphi 0, %s134
      %s151 = sphi 0, %s135
      %s159 = sphi 0, %s161
      %s162 = sphi 0, %s159
      %s163 = sphi 0, %s162
      %s179 = sphi 0, %s163
    $region4: #{generation_step.1} parent=1 // loop_header_branch
      %17 = sbr.rel (%p15) target = $region8
    $region5: #{generation_step.1} parent=1 // loop_body
      %s19 = ssub.s32 %s14, 1
      %s20 = ssub.s32 %s14, 2
      %s30 = sadd.s32 1, %s23
      %p31 = scmp.ge.s32.totalorder %s30, 4
      %s32 = scalar_select %p31, 0, %s30
      %s33 = sadd.s32 1, %s22
      %s34 = scalar_select %p31, %s33, %s22
      %p35 = scmp.ge.s32.totalorder %s34, 1
      %s36 = scalar_select %p35, 0, %s34
      %s37 = sadd.s32 1, %s21
      %s38 = scalar_select %p35, %s37, %s21
      %p39 = scmp.ge.s32.totalorder %s38, 1
      %s40 = scalar_select %p39, 0, %s38
      %s41 = ssub.s32 %s21, %s40
      %p42 = scmp.eq.s32.totalorder %s41, 0
      %s44 = sadd.s32 %s43, 1
      %s45 = scalar_select %p42, %s43, %s44
      %p48 = pneg %p42
      %p49 = scmp.eq.s32.totalorder %s14, 3
      %p50 = por %p48, %p49
      %p51 = scmp.ne.s32.totalorder %s43, %s46
      %p52 = scmp.eq.s32.totalorder %s14, 0
      %p53 = por %p51, %p52
      %p54 = scmp.ne.s32.totalorder %s43, %s46
      %p55 = scmp.eq.s32.totalorder %s19, 3
      %p56 = por %p54, %p55
      %p57 = scmp.ne.s32.totalorder %s46, %s47
      %p58 = scmp.eq.s32.totalorder %s19, 0
      %p59 = por %p57, %p58
      %p60 = scmp.ne.s32.totalorder %s46, %s47
      %p61 = scmp.eq.s32.totalorder %s20, 3
      %p62 = por %p60, %p61
      %p64 = scmp.ne.s32.totalorder %s47, %s63
      %p65 = scmp.eq.s32.totalorder %s20, 0
      %p66 = por %p64, %p65
      %s67 = ssub.s32 %s21, %s40
      %p68 = scmp.eq.s32.totalorder %s67, 0
      %s70 = sadd.s32 %s69, 1
      %s71 = scalar_select %p68, %s69, %s70
      %p74 = pneg %p68
      %p75 = scmp.eq.s32.totalorder %s14, 3
      %p76 = por %p74, %p75
      %p77 = scmp.ne.s32.totalorder %s69, %s72
      %p78 = scmp.eq.s32.totalorder %s14, 0
      %p79 = por %p77, %p78
      %p80 = scmp.ne.s32.totalorder %s69, %s72
      %p81 = scmp.eq.s32.totalorder %s19, 3
      %p82 = por %p80, %p81
      %p83 = scmp.ne.s32.totalorder %s72, %s73
      %p84 = scmp.eq.s32.totalorder %s19, 0
      %p85 = por %p83, %p84
      %p86 = scmp.ne.s32.totalorder %s72, %s73
      %p87 = scmp.eq.s32.totalorder %s20, 3
      %p88 = por %p86, %p87
      %p90 = scmp.ne.s32.totalorder %s73, %s89
      %p91 = scmp.eq.s32.totalorder %s20, 0
      %p92 = por %p90, %p91
      %s93 = smul.u32 %s22, 4
      %s94 = sadd.s32 %s93, %s23
      %s95 = smul.u32 %s36, 4
      %s96 = sadd.s32 %s95, %s32
      %s97 = ssub.s32 %s94, %s96
      %p98 = scmp.eq.s32.totalorder %s97, 0
      %s100 = sadd.s32 %s99, 1
      %s101 = scalar_select %p98, %s99, %s100
      %p104 = pneg %p98
      %p105 = scmp.eq.s32.totalorder %s14, 3
      %p106 = por %p104, %p105
      %p107 = scmp.ne.s32.totalorder %s99, %s102
      %p108 = scmp.eq.s32.totalorder %s14, 0
      %p109 = por %p107, %p108
      %p110 = scmp.ne.s32.totalorder %s99, %s102
      %p111 = scmp.eq.s32.totalorder %s19, 3
      %p112 = por %p110, %p111
      %p113 = scmp.ne.s32.totalorder %s102, %s103
      %p114 = scmp.eq.s32.totalorder %s19, 0
      %p115 = por %p113, %p114
      %p116 = scmp.ne.s32.totalorder %s102, %s103
      %p117 = scmp.eq.s32.totalorder %s20, 3
      %p118 = por %p116, %p117
      %p120 = scmp.ne.s32.totalorder %s103, %s119
      %p121 = scmp.eq.s32.totalorder %s20, 0
      %p122 = por %p120, %p121
      %s123 = smul.u32 %s22, 4
      %s124 = sadd.s32 %s123, %s23
      %s125 = smul.u32 %s36, 4
      %s126 = sadd.s32 %s125, %s32
      %s127 = ssub.s32 %s21, %s40
      %s128 = ssub.s32 %s124, %s126
      %s129 = sor.u32 %s127, %s128
      %p130 = scmp.eq.s32.totalorder %s129, 0
      %s132 = sadd.s32 %s131, 1
      %s133 = scalar_select %p130, %s131, %s132
      %p136 = pneg %p130
      %p137 = scmp.eq.s32.totalorder %s14, 3
      %p138 = por %p136, %p137
      %p139 = scmp.ne.s32.totalorder %s131, %s134
      %p140 = scmp.eq.s32.totalorder %s14, 0
      %p141 = por %p139, %p140
      %p142 = scmp.ne.s32.totalorder %s131, %s134
      %p143 = scmp.eq.s32.totalorder %s19, 3
      %p144 = por %p142, %p143
      %p145 = scmp.ne.s32.totalorder %s134, %s135
      %p146 = scmp.eq.s32.totalorder %s19, 0
      %p147 = por %p145, %p146
      %p148 = scmp.ne.s32.totalorder %s134, %s135
      %p149 = scmp.eq.s32.totalorder %s20, 3
      %p150 = por %p148, %p149
      %p152 = scmp.ne.s32.totalorder %s135, %s151
      %p153 = scmp.eq.s32.totalorder %s20, 0
      %p154 = por %p152, %p153
      %s155 = ssub.s32 %s22, %s36
      %s156 = ssub.s32 %s21, %s40
      %s157 = sor.u32 %s155, %s156
      %p158 = scmp.eq.s32.totalorder %s157, 0
      %s160 = sadd.s32 %s159, 1
      %s161 = scalar_select %p158, %s159, %s160
      %p164 = pneg %p158
      %p165 = scmp.eq.s32.totalorder %s14, 3
      %p166 = por %p164, %p165
      %p167 = scmp.ne.s32.totalorder %s159, %s162
      %p168 = scmp.eq.s32.totalorder %s14, 0
      %p169 = por %p167, %p168
      %p170 = scmp.ne.s32.totalorder %s159, %s162
      %p171 = scmp.eq.s32.totalorder %s19, 3
      %p172 = por %p170, %p171
      %p173 = scmp.ne.s32.totalorder %s162, %s163
      %p174 = scmp.eq.s32.totalorder %s19, 0
      %p175 = por %p173, %p174
      %p176 = scmp.ne.s32.totalorder %s162, %s163
      %p177 = scmp.eq.s32.totalorder %s20, 3
      %p178 = por %p176, %p177
      %p180 = scmp.ne.s32.totalorder %s163, %s179
      %p181 = scmp.eq.s32.totalorder %s20, 0
      %p182 = por %p180, %p181
      %p183 = scmp.le.s32.totalorder 1, %s14
      %p184 = scmp.lt.s32.totalorder %s14, 5
      %p185 = pnand %p183, %p184
      %p186 = pneg %p185
      // Predicated region
      $region9: #{generation_step.1} parent=5 // pred_check
        _
      $region10: #{generation_step.1} parent=5 // pred_check_branch
        %188 = sbr.rel (%p185) target = $region12
      $region11: #{generation_step.1} parent=5 // pred_region
        %s189 = ssub.s32 %s14, 1
        // Predicated region
        $region13: #{generation_step.1} parent=11 // pred_check
          %p190 = pneg %p59
        $region14: #{generation_step.1} parent=11 // pred_check_branch
          %192 = sbr.rel (%p190) target = $region16
        $region15: #{generation_step.1} parent=11 // pred_region
          %p193 = scmp.lt.s32.totalorder %s24, 0
          %s194 = scalar_select %p193, %s24, 0
          %s195 = smul.addr %s194, 8
          %s196 = scalar_lea.vmem %s0, %s195
        $region16: #{generation_step.1} parent=11 // pred_fallthru
          _
        // Predicated region
        $region17: #{generation_step.1} parent=11 // pred_check
          %p197 = pneg %p85
        $region18: #{generation_step.1} parent=11 // pred_check_branch
          %199 = sbr.rel (%p197) target = $region20
        $region19: #{generation_step.1} parent=11 // pred_region
          %p200 = scmp.lt.s32.totalorder %s24, 0
          %s201 = scalar_select %p200, %s24, 0
          %s202 = smul.addr %s201, 2
          %s203 = smul.addr %s202, 4
          %s204 = scalar_lea.vmem %s1, %s203
        $region20: #{generation_step.1} parent=11 // pred_fallthru
          _
      $region12: #{generation_step.1} parent=5 // pred_fallthru
        _
      %p205 = scmp.lt.s32.totalorder %s14, 4
      // Predicated region
      $region21: #{generation_step.1} parent=5 // pred_check
        %p206 = pneg %p205
      $region22: #{generation_step.1} parent=5 // pred_check_branch
        %208 = sbr.rel (%p206) target = $region24
      $region23: #{generation_step.1} parent=5 // pred_region
        // Predicated region
        $region25: #{generation_step.1} parent=23 // pred_check
          %p209 = pneg %p109
        $region26: #{generation_step.1} parent=23 // pred_check_branch
          %211 = sbr.rel (%p209) target = $region28
        $region27: #{generation_step.1} parent=23 // pred_region
          %s212 = sand.u32 %s99, 1
          %s213 = scalar_lea.sflag [#allocation5], %s212
          %s214 = sand.u32 %s99, 1
          %s215 = smul.addr %s214, 128
          %s216 = scalar_lea.vmem [#allocation4], %s215
          %s217 = smul.u32 %s22, 4
          %s218 = sadd.s32 %s217, %s23
          %s220 = ssub.s32 2048, 2048
          %221 = vsyncadd %s213, %s220
          %s222 = smul.addr %s218, 64
          %s223 = scalar_lea.hbm %s2, %s222
          %s224 = sshll.u32 %s216, 4
          %s225 = int_to_ptr.vmem [resolvable:$true] %s224
          %230 = dma.hbm_to_vmem [thread:$0]  %s223, 2048, %s225, %s213, 256, 64, 4
        $region28: #{generation_step.1} parent=23 // pred_fallthru
          _
      $region24: #{generation_step.1} parent=5 // pred_fallthru
        _
      %p231 = scmp.le.s32.totalorder 1, %s14
      %p232 = scmp.lt.s32.totalorder %s14, 5
      %p233 = pnand %p231, %p232
      %p234 = pneg %p233
      // Predicated region
      $region29: #{generation_step.1} parent=5 // pred_check
        _
      $region30: #{generation_step.1} parent=5 // pred_check_branch
        %236 = sbr.rel (%p233) target = $region32
      $region31: #{generation_step.1} parent=5 // pred_region
        %s237 = ssub.s32 %s14, 1
        %s238 = sand.u32 %s102, 1
        %s239 = scalar_lea.sflag [#allocation5], %s238
        %s240 = sand.u32 %s102, 1
        %s241 = smul.addr %s240, 128
        %s242 = scalar_lea.vmem [#allocation4], %s241
        // Predicated region
        $region33: #{generation_step.1} parent=31 // pred_check
          %p243 = pneg %p115
        $region34: #{generation_step.1} parent=31 // pred_check_branch
          %245 = sbr.rel (%p243) target = $region36
        $region35: #{generation_step.1} parent=31 // pred_region
          %246 = dma.done %s239, 2048
        $region36: #{generation_step.1} parent=31 // pred_fallthru
          _
        %p247 = scmp.lt.s32.totalorder %s24, 0
        %s248 = scalar_select %p247, %s24, 0
        %s249 = smul.addr %s248, 8
        %s250 = scalar_lea.vmem %s0, %s249
        %p251 = pneg %p59
        %p252 = pneg %p56
        %p253 = scmp.lt.s32.totalorder %s24, 0
        %s254 = scalar_select %p253, %s24, 0
        %s255 = smul.addr %s254, 2
        %s256 = smul.addr %s255, 4
        %s257 = scalar_lea.vmem %s1, %s256
        %p258 = pneg %p85
        %p259 = pneg %p82
        %s260 = sand.u32 %s102, 1
        %s261 = scalar_lea.sflag [#allocation5], %s260
        %s262 = sand.u32 %s102, 1
        %s263 = smul.addr %s262, 128
        %s264 = scalar_lea.vmem [#allocation4], %s263
        %p265 = pneg %p115
        %p266 = pneg %p112
        %p267 = pneg %p147
        %p268 = pneg %p144
        %s269 = smul.u32 %s25, 4
        %s270 = sadd.s32 %s269, %s26
        %p271 = scmp.lt.s32.totalorder %s24, 0
        %s272 = scalar_select %p271, %s24, 0
        %p273 = scmp.lt.s32.totalorder %s270, 3
        %s274 = scalar_select %p273, %s270, 3
        %s275 = smul.addr %s272, 4
        %s276 = sadd.s32 %s274, %s275
        %s277 = smul.addr %s276, 8
        %s278 = scalar_lea.vmem %s3, %s277
        %p279 = pneg %p175
        %p280 = pneg %p172
        %p281 = scmp.lt.s32.totalorder %s25, 0
        %s282 = scalar_select %p281, %s25, 0
        %p283 = scmp.lt.s32.totalorder %s24, 0
        %s284 = scalar_select %p283, %s24, 0
        %s285 = sadd.s32 %s284, %s282
        %s286 = smul.addr %s285, 8
        %s287 = scalar_lea.vmem %s4, %s286
        %p288 = scmp.lt.s32.totalorder %s24, 0
        %s289 = scalar_select %p288, %s24, 0
        %s290 = smul.addr %s289, 8
        %s291 = scalar_lea.vmem %s0, %s290
        %p292 = scmp.lt.s32.totalorder %s24, 0
        %s293 = scalar_select %p292, %s24, 0
        %s294 = smul.addr %s293, 2
        %s295 = smul.addr %s294, 4
        %s296 = scalar_lea.vmem %s1, %s295
        %s297 = smul.u32 %s25, 4
        %s298 = sadd.s32 %s297, %s26
        %s299 = smul.u32 %s25, 4
        %s300 = sadd.s32 %s299, %s26
        %p301 = scmp.lt.s32.totalorder %s24, 0
        %s302 = scalar_select %p301, %s24, 0
        %p303 = scmp.lt.s32.totalorder %s300, 3
        %s304 = scalar_select %p303, %s300, 3
        %s305 = smul.addr %s302, 4
        %s306 = sadd.s32 %s304, %s305
        %s307 = smul.addr %s306, 8
        %s308 = scalar_lea.vmem %s3, %s307
        %s309 = smul.u32 %s25, 4
        %s310 = sadd.s32 %s309, %s26
        %p311 = scmp.lt.s32.totalorder %s25, 0
        %s312 = scalar_select %p311, %s25, 0
        %p313 = scmp.lt.s32.totalorder %s24, 0
        %s314 = scalar_select %p313, %s24, 0
        %s315 = sadd.s32 %s314, %s312
        %s316 = smul.addr %s315, 8
        %s317 = scalar_lea.vmem %s4, %s316
        %s319 = smul.u32 %s25, 4
        %s320 = sadd.s32 %s319, %s26
        %s321 = smul.u32 %s320, 128
        %p322 = scmp.eq.s32.totalorder %s26, 0
        // Predicated region
        $region37: #{generation_step.1} parent=31 // pred_check
          %p323 = pneg %p322
        $region38: #{generation_step.1} parent=31 // pred_check_branch
          %325 = sbr.rel (%p323) target = $region40
        $region39: #{generation_step.1} parent=31 // pred_region
          %vm326 = vcmask 7168
          %327 = vst.msk [vmem:[#allocation2] sm:$0xff] %vm326, -inf
          %328 = vst.msk [vmem:[#allocation3] sm:$0xff] %vm326, 0.0
        $region40: #{generation_step.1} parent=31 // pred_fallthru
          _
        %v329 = vld [vmem:[%s296] sm:$0xff]
        %v330 = vld [vmem:[%s242] sm:$0xf]
        %v331 = vld [vmem:[%s242 + $0x4] sm:$0xf]
        %v332 = vld [vmem:[%s242 + $0x8] sm:$0xf]
        %v333 = vld [vmem:[%s242 + $0xc] sm:$0xf]
        %v334 = vld [vmem:[%s242 + $0x10] sm:$0xf]
        %v335 = vld [vmem:[%s242 + $0x14] sm:$0xf]
        %v336 = vld [vmem:[%s242 + $0x18] sm:$0xf]
        %v337 = vld [vmem:[%s242 + $0x1c] sm:$0xf]
        %v338 = vld [vmem:[%s242 + $0x20] sm:$0xf]
        %v339 = vld [vmem:[%s242 + $0x24] sm:$0xf]
        %v340 = vld [vmem:[%s242 + $0x28] sm:$0xf]
        %v341 = vld [vmem:[%s242 + $0x2c] sm:$0xf]
        %v342 = vld [vmem:[%s242 + $0x30] sm:$0xf]
        %v343 = vld [vmem:[%s242 + $0x34] sm:$0xf]
        %v344 = vld [vmem:[%s242 + $0x38] sm:$0xf]
        %v345 = vld [vmem:[%s242 + $0x3c] sm:$0xf]
        %v346 = vld [vmem:[%s242 + $0x40] sm:$0xf]
        %v347 = vld [vmem:[%s242 + $0x44] sm:$0xf]
        %v348 = vld [vmem:[%s242 + $0x48] sm:$0xf]
        %v349 = vld [vmem:[%s242 + $0x4c] sm:$0xf]
        %v350 = vld [vmem:[%s242 + $0x50] sm:$0xf]
        %v351 = vld [vmem:[%s242 + $0x54] sm:$0xf]
        %v352 = vld [vmem:[%s242 + $0x58] sm:$0xf]
        %v353 = vld [vmem:[%s242 + $0x5c] sm:$0xf]
        %v354 = vld [vmem:[%s242 + $0x60] sm:$0xf]
        %v355 = vld [vmem:[%s242 + $0x64] sm:$0xf]
        %v356 = vld [vmem:[%s242 + $0x68] sm:$0xf]
        %v357 = vld [vmem:[%s242 + $0x6c] sm:$0xf]
        %v358 = vld [vmem:[%s242 + $0x70] sm:$0xf]
        %v359 = vld [vmem:[%s242 + $0x74] sm:$0xf]
        %v360 = vld [vmem:[%s242 + $0x78] sm:$0xf]
        %v361 = vld [vmem:[%s242 + $0x7c] sm:$0xf]
        %v363 = vunpack.c.l.b16 %v329
        %v364 = vunpack.c.h.b16 %v329
        %v365 = vpack.c.b16 %v363, %v363
        %v366 = vpack.c.b16 %v364, %v364
        %v401 = vunpack.c.l.b16 %v330
        %v402 = vunpack.c.l.b16 %v331
        %v403 = vunpack.c.l.b16 %v332
        %v404 = vunpack.c.l.b16 %v333
        %v405 = vunpack.c.l.b16 %v334
        %v406 = vunpack.c.l.b16 %v335
        %v407 = vunpack.c.l.b16 %v336
        %v408 = vunpack.c.l.b16 %v337
        %v409 = vunpack.c.l.b16 %v338
        %v410 = vunpack.c.l.b16 %v339
        %v411 = vunpack.c.l.b16 %v340
        %v412 = vunpack.c.l.b16 %v341
        %v413 = vunpack.c.l.b16 %v342
        %v414 = vunpack.c.l.b16 %v343
        %v415 = vunpack.c.l.b16 %v344
        %v416 = vunpack.c.l.b16 %v345
        %v417 = vunpack.c.l.b16 %v346
        %v418 = vunpack.c.l.b16 %v347
        %v419 = vunpack.c.l.b16 %v348
        %v420 = vunpack.c.l.b16 %v349
        %v421 = vunpack.c.l.b16 %v350
        %v422 = vunpack.c.l.b16 %v351
        %v423 = vunpack.c.l.b16 %v352
        %v424 = vunpack.c.l.b16 %v353
        %v425 = vunpack.c.l.b16 %v354
        %v426 = vunpack.c.l.b16 %v355
        %v427 = vunpack.c.l.b16 %v356
        %v428 = vunpack.c.l.b16 %v357
        %v429 = vunpack.c.l.b16 %v358
        %v430 = vunpack.c.l.b16 %v359
        %v431 = vunpack.c.l.b16 %v360
        %v432 = vunpack.c.l.b16 %v361
        %v433 = vpack.c.b16 %v402, %v401
        %v434 = vpack.c.b16 %v404, %v403
        %v435 = vpack.c.b16 %v406, %v405
        %v436 = vpack.c.b16 %v408, %v407
        %v437 = vpack.c.b16 %v410, %v409
        %v438 = vpack.c.b16 %v412, %v411
        %v439 = vpack.c.b16 %v414, %v413
        %v440 = vpack.c.b16 %v416, %v415
        %v441 = vpack.c.b16 %v418, %v417
        %v442 = vpack.c.b16 %v420, %v419
        %v443 = vpack.c.b16 %v422, %v421
        %v444 = vpack.c.b16 %v424, %v423
        %v445 = vpack.c.b16 %v426, %v425
        %v446 = vpack.c.b16 %v428, %v427
        %v447 = vpack.c.b16 %v430, %v429
        %v448 = vpack.c.b16 %v432, %v431
        %465 = vmatprep.subr.bf16.mxu0 0
        %466 = vmatpush1.bf16.msra.mxu0 %v433
        %467 = vmatprep.subr.bf16.mxu0 0
        %468 = vmatpush1.bf16.msra.mxu0 %v434
        %469 = vmatprep.subr.bf16.mxu0 0
        %470 = vmatpush1.bf16.msra.mxu0 %v435
        %471 = vmatprep.subr.bf16.mxu0 0
        %472 = vmatpush1.bf16.msra.mxu0 %v436
        %473 = vmatprep.subr.bf16.mxu0 0
        %474 = vmatpush1.bf16.msra.mxu0 %v437
        %475 = vmatprep.subr.bf16.mxu0 0
        %476 = vmatpush1.bf16.msra.mxu0 %v438
        %477 = vmatprep.subr.bf16.mxu0 0
        %478 = vmatpush1.bf16.msra.mxu0 %v439
        %479 = vmatprep.subr.bf16.mxu0 0
        %480 = vmatpush1.bf16.msra.mxu0 %v440
        %481 = vmatprep.subr.bf16.mxu0 0
        %482 = vmatpush1.bf16.msra.mxu0 %v441
        %483 = vmatprep.subr.bf16.mxu0 0
        %484 = vmatpush1.bf16.msra.mxu0 %v442
        %485 = vmatprep.subr.bf16.mxu0 0
        %486 = vmatpush1.bf16.msra.mxu0 %v443
        %487 = vmatprep.subr.bf16.mxu0 0
        %488 = vmatpush1.bf16.msra.mxu0 %v444
        %489 = vmatprep.subr.bf16.mxu0 0
        %490 = vmatpush1.bf16.msra.mxu0 %v445
        %491 = vmatprep.subr.bf16.mxu0 0
        %492 = vmatpush1.bf16.msra.mxu0 %v446
        %493 = vmatprep.subr.bf16.mxu0 0
        %494 = vmatpush1.bf16.msra.mxu0 %v447
        %495 = vmatprep.subr.bf16.mxu0 0
        %496 = vmatpush1.bf16.msra.mxu0 %v448
        %497 = vmatprep.mubr.bf16.mxu0 %v366
        %498 = vmatmul.mubr.bf16.gmra.mrb[0].mxu0 %v365
        %v499 = vpop.f32.mrb[0].mxu0
        %v500 = vadd.f32 0.0, %v499
        %v501 = vpop.f32.mrb[0].mxu0
        %v502 = vpop.f32.mrb[0].mxu0
        %v503 = vpop.f32.mrb[0].mxu0
        %504 = vdwg.mxu0
        %v505 = vld [vmem:[%s291] sm:$0xff]
        %v506 = vlaneseq
        %v507 = vand.u32 %v506, 127
        %s508 = ssub.s32 512, %s321
        %v509 = vstv %s508
        %vm510 = vcmp.lt.s32.totalorder %v507, %v509
        %vm511 = vcmp.lt.s32.totalorder %v505, 0
        %v512 = vstv %s321
        %v513 = vsub.s32 %v505, %v512
        %514 = vset.pattern.permute.xlu0 0
        %515 = vperm.xlu0 %514, %v513
        %v516 = vpop.permute.xlu0 %515
        %vm517 = vcmp.eq.s32.totalorder %v507, %v516
        %v518 = vsel %vm511, 1, 0
        %519 = vset.pattern.permute.xlu0 0
        %520 = vperm.xlu0 %519, %v518
        %v521 = vpop.permute.xlu0 %520
        %vm522 = vcmp.eq.s32.totalorder %v521, 1
        %vm523 = vmor %vm522, %vm517
        %vm524 = vmand %vm510, %vm523
        %v525 = vsel %vm524, %v500, -1e+30
        %526 = vst [vmem:[%s308] sm:$0xff] %v525
        %527 = vmax.xlane.f32.xlu0 %v525
        %v528 = vpop.xlane.xlu0 %527
        %v529 = vld [vmem:[#allocation2] sm:$0xff]
        %v530 = vmax.f32 %v529, %v528
        %v531 = vld [vmem:[#allocation3] sm:$0xff]
        %v532 = vsub.f32 %v529, %v530
        %v533 = vmul.f32 %v532, 1.442695
        %v534 = vpow.pop %v533
        %v535 = vmul.f32 %v531, %v534
        %537 = vset.pattern.permute.xlu0 0
        %538 = vperm.xlu0 %537, %v530
        %v539 = vpop.permute.xlu0 %538
        %v541 = vsub.f32 %v525, %v539
        %v542 = vmul.f32 %v541, 1.442695
        %v543 = vpow.pop %v542
        %544 = vadd.xlane.f32.xlu0 %v543
        %v545 = vpop.xlane.xlu0 %544
        %v546 = vadd.f32 %v535, %v545
        %vm547 = vcmask 7168
        %548 = vst.msk [vmem:[#allocation3] sm:$0xff] %vm547, %v546
        %549 = vst.msk [vmem:[#allocation2] sm:$0xff] %vm547, %v530
        %p550 = scmp.eq.s32.totalorder %s26, 3
        // Predicated region
        $region41: #{generation_step.1} parent=31 // pred_check
          %p551 = pneg %p550
        $region42: #{generation_step.1} parent=31 // pred_check_branch
          %553 = sbr.rel (%p551) target = $region44
        $region43: #{generation_step.1} parent=31 // pred_region
          %v554 = vld [vmem:[#allocation2] sm:$0xff]
          %v555 = vld [vmem:[#allocation3] sm:$0xff]
          %v556 = vlog2.pop %v555
          %v557 = vmul.f32 %v556, 0.6931472
          %v558 = vadd.f32 %v554, %v557
          %559 = vst.msk [vmem:[%s317] sm:$0xff] %vm547, %v558
        $region44: #{generation_step.1} parent=31 // pred_fallthru
          _
        %s560 = smul.u32 %s25, 4
        %s561 = sadd.s32 %s560, %s26
        %p562 = scmp.lt.s32.totalorder %s24, 0
        %s563 = scalar_select %p562, %s24, 0
        %p564 = scmp.lt.s32.totalorder %s561, 3
        %s565 = scalar_select %p564, %s561, 3
        %s566 = smul.addr %s563, 4
        %s567 = sadd.s32 %s565, %s566
        %s568 = smul.addr %s567, 8
        %s569 = scalar_lea.vmem %s3, %s568
        %p570 = scmp.lt.s32.totalorder %s25, 0
        %s571 = scalar_select %p570, %s25, 0
        %p572 = scmp.lt.s32.totalorder %s24, 0
        %s573 = scalar_select %p572, %s24, 0
        %s574 = sadd.s32 %s573, %s571
        %s575 = smul.addr %s574, 8
        %s576 = scalar_lea.vmem %s4, %s575
        // Predicated region
        $region45: #{generation_step.1} parent=31 // pred_check
          %p577 = pneg %p144
        $region46: #{generation_step.1} parent=31 // pred_check_branch
          %579 = sbr.rel (%p577) target = $region48
        $region47: #{generation_step.1} parent=31 // pred_region
          %s580 = smul.u32 %s25, 4
          %s581 = sadd.s32 %s580, %s26
        $region48: #{generation_step.1} parent=31 // pred_fallthru
          _
        // Predicated region
        $region49: #{generation_step.1} parent=31 // pred_check
          %p582 = pneg %p172
        $region50: #{generation_step.1} parent=31 // pred_check_branch
          %584 = sbr.rel (%p582) target = $region52
        $region51: #{generation_step.1} parent=31 // pred_region
          _
        $region52: #{generation_step.1} parent=31 // pred_fallthru
          _
        // Predicated region
        $region53: #{generation_step.1} parent=31 // pred_check
          %p585 = pneg %p172
        $region54: #{generation_step.1} parent=31 // pred_check_branch
          %587 = sbr.rel (%p585) target = $region56
        $region55: #{generation_step.1} parent=31 // pred_region
          %p588 = scmp.lt.s32.totalorder %s25, 0
          %s589 = scalar_select %p588, %s25, 0
          %p590 = scmp.lt.s32.totalorder %s24, 0
          %s591 = scalar_select %p590, %s24, 0
          %s592 = sadd.s32 %s591, %s589
          %s593 = smul.addr %s592, 8
          %s594 = scalar_lea.vmem %s4, %s593
        $region56: #{generation_step.1} parent=31 // pred_fallthru
          _
      $region32: #{generation_step.1} parent=5 // pred_fallthru
        _
      %p595 = scmp.le.s32.totalorder 2, %s14
      // Predicated region
      $region57: #{generation_step.1} parent=5 // pred_check
        %p596 = pneg %p595
      $region58: #{generation_step.1} parent=5 // pred_check_branch
        %598 = sbr.rel (%p596) target = $region60
      $region59: #{generation_step.1} parent=5 // pred_region
        %s599 = ssub.s32 %s14, 2
        // Predicated region
        $region61: #{generation_step.1} parent=59 // pred_check
          %p600 = pneg %p150
        $region62: #{generation_step.1} parent=59 // pred_check_branch
          %602 = sbr.rel (%p600) target = $region64
        $region63: #{generation_step.1} parent=59 // pred_region
          %s603 = smul.u32 %s28, 4
          %s604 = sadd.s32 %s603, %s29
          %p605 = scmp.lt.s32.totalorder %s27, 0
          %s606 = scalar_select %p605, %s27, 0
          %p607 = scmp.lt.s32.totalorder %s604, 3
          %s608 = scalar_select %p607, %s604, 3
          %s609 = smul.addr %s606, 4
          %s610 = sadd.s32 %s608, %s609
          %s611 = smul.addr %s610, 8
          %s612 = scalar_lea.vmem %s3, %s611
        $region64: #{generation_step.1} parent=59 // pred_fallthru
          _
      $region60: #{generation_step.1} parent=5 // pred_fallthru
        _
    $region6: #{generation_step.1} parent=1 // loop_footer
      %s18 = sadd.s32 1, %s14
    $region7: #{generation_step.1} parent=1 // loop_footer_branch
      %13 = sbr.rel target = $region3
    $region8: #{generation_step.1} parent=1 // loop_exit
      _
    %613 = vsyncpa [#allocation5], 1
    %s614 = scalar_lea.sflag [#allocation5], 1
    %615 = vsyncpa %s614, 1

</llo_original>
